<compile_context>
chip_gen: v6e
topology: v6e:2x2x1
jax: 0.10.0
libtpu: 0.0.40
codegen_flags: <defaults>
</compile_context>

<pallas_src>
import jax
import jax.numpy as jnp
from jax import lax
from jax.experimental import pallas as pl
from jax.experimental.pallas import tpu as pltpu


def _spp_kernel(x_ref, o1_ref, o2_ref):
    D, H, W, TNC = x_ref.shape
    Do1, Ho1, Wo1, _ = o1_ref.shape
    _, Ho2, Wo2, _ = o2_ref.shape

    # ------------- pool1: MaxPool3d(kernel=(2,3,3), stride=(2,3,3)) --------
    # D and H reductions: leading-axis reshapes (free views) + VPU maxima.
    xv = x_ref[0:2 * Do1, 0:3 * Ho1, 0:3 * Wo1, :]          # (2Do1, 3Ho1, 3Wo1, TNC)
    xv = jnp.max(xv.reshape(Do1, 2, 3 * Ho1, 3 * Wo1, TNC), axis=1)
    xv = jnp.max(xv.reshape(Do1, Ho1, 3, 3 * Wo1, TNC), axis=2)  # (Do1,Ho1,3Wo1,TNC)
    # W reduction: short loop over output columns operating on whole
    # (Do1,Ho1,:,TNC) slabs; assemble once and do a single dense store.
    cols = [jnp.max(xv[:, :, 3 * ow:3 * ow + 3, :], axis=2, keepdims=True)
            for ow in range(Wo1)]
    o1_ref[...] = cols[0] if Wo1 == 1 else jnp.concatenate(cols, axis=2)

    # ------ pool2: MaxPool3d(kernel=(1,2,2), stride=(1,2,2), pad=(0,1,1)) ---
    # -inf padding of a max-pool == clipping each window to the valid range.
    # H reduction (leading axis): clipped width-1 boundary rows plus the
    # vectorized interior width-2 windows, concatenated along the leading axis.
    n_full_h = (H - 1) // 2                      # number of width-2 H windows
    pieces = [x_ref[:, 0:1, :, :]]               # oh = 0 -> row 0 only
    if n_full_h > 0:
        mid = x_ref[:, 1:1 + 2 * n_full_h, :, :]
        pieces.append(jnp.max(mid.reshape(D, n_full_h, 2, W, TNC), axis=2))
    if H % 2 == 0:                               # last window is row H-1 only
        pieces.append(x_ref[:, H - 1:H, :, :])
    xh = pieces[0] if len(pieces) == 1 else jnp.concatenate(pieces, axis=1)
    # xh: (D, Ho2, W, TNC)

    # W reduction: clipped contiguous sublane windows, whole-slab maxima,
    # one dense full-block store.
    cols = []
    for ow in range(Wo2):
        ws = max(0, 2 * ow - 1)
        we = min(W, 2 * ow + 1)
        cols.append(jnp.max(xh[:, :, ws:we, :], axis=2, keepdims=True))
    o2_ref[...] = cols[0] if Wo2 == 1 else jnp.concatenate(cols, axis=2)


def _choose_lane_tile(nc, per_lane_elems, itemsize,
                      budget_bytes=16 * 1024 * 1024):
    """Lane-axis (N*C) tile: multiple of 128 where possible, sized so the
    double-buffered blocks + in-kernel temporaries stay well inside VMEM
    (v7x-safe; scoped limit is raised explicitly below)."""
    per_lane_bytes = max(1, per_lane_elems * itemsize)
    max_lanes = budget_bytes // per_lane_bytes
    if nc <= max_lanes or nc % 128 != 0:
        return int(nc)                 # full lane dim is always a legal block
    tnc = (max_lanes // 128) * 128
    return int(max(128, min(tnc, 2048)))


@jax.jit
def spp_forward(x):
    """x: (N, C, D, H, W) -> (N, C*(D*H*W + Do1*Ho1*Wo1 + Do2*Ho2*Wo2))."""
    N, C, D, H, W = x.shape
    NC = N * C

    Do1, Ho1, Wo1 = D // 2, H // 3, W // 3
    Do2, Ho2, Wo2 = D, H // 2 + 1, W // 2 + 1

    if Do1 == 0 or Ho1 == 0 or Wo1 == 0:
        raise ValueError(
            f"SPP pool1 requires D >= 2, H >= 3, W >= 3; got D={D}, H={H}, W={W}")

    # (N, C, D, H, W) -> (D, H, W, N*C): pooled dims leading, N*C on lanes.
    # TODO(synk): this input transpose and the final concat (which re-copies x)
    # are extra HBM passes kept only to match torch's NCDHW cat semantics.
    xk = jnp.transpose(x, (2, 3, 4, 0, 1)).reshape(D, H, W, NC)

    itemsize = jnp.dtype(x.dtype).itemsize
    per_lane_elems = (4 * D * H * W            # input block (x2 buf) + temps
                      + 2 * (Do1 * Ho1 * Wo1 + Do2 * Ho2 * Wo2))
    tnc = _choose_lane_tile(NC, per_lane_elems, itemsize)
    grid = (pl.cdiv(NC, tnc),)

    p1, p2 = pl.pallas_call(
        _spp_kernel,
        grid=grid,
        in_specs=[pl.BlockSpec((D, H, W, tnc), lambda i: (0, 0, 0, i))],
        out_specs=[
            pl.BlockSpec((Do1, Ho1, Wo1, tnc), lambda i: (0, 0, 0, i)),
            pl.BlockSpec((Do2, Ho2, Wo2, tnc), lambda i: (0, 0, 0, i)),
        ],
        out_shape=[
            jax.ShapeDtypeStruct((Do1, Ho1, Wo1, NC), x.dtype),
            jax.ShapeDtypeStruct((Do2, Ho2, Wo2, NC), x.dtype),
        ],
        compiler_params=pltpu.CompilerParams(
            dimension_semantics=("parallel",),
            vmem_limit_bytes=48 * 1024 * 1024,
        ),
    )(xk)

    # Back to PyTorch NCDHW flatten order, then concat (small glue vs x).
    x_flat = x.reshape(N, -1)
    x1 = jnp.transpose(p1.reshape(Do1, Ho1, Wo1, N, C),
                       (3, 4, 0, 1, 2)).reshape(N, -1)
    x2 = jnp.transpose(p2.reshape(Do2, Ho2, Wo2, N, C),
                       (3, 4, 0, 1, 2)).reshape(N, -1)
    return jnp.concatenate([x_flat, x1, x2], axis=1)


if __name__ == "__main__":
    key = jax.random.PRNGKey(0)
    # Small shapes consistent with MaxPool3d 5-D input: N=2, C=4, D=4, H=W=6.
    x = jax.random.normal(key, (2, 4, 4, 6, 6), dtype=jnp.float32)

    out = jax.block_until_ready(spp_forward(x))

    # Pure-JAX reference (same semantics as torch MaxPool3d with -inf padding).
    p1_ref = lax.reduce_window(x, -jnp.inf, lax.max,
                               (1, 1, 2, 3, 3), (1, 1, 2, 3, 3),
                               [(0, 0)] * 5)
    p2_ref = lax.reduce_window(x, -jnp.inf, lax.max,
                               (1, 1, 1, 2, 2), (1, 1, 1, 2, 2),
                               [(0, 0), (0, 0), (0, 0), (1, 1), (1, 1)])
    ref = jnp.concatenate(
        [x.reshape(2, -1), p1_ref.reshape(2, -1), p2_ref.reshape(2, -1)], axis=1)

    assert out.shape == ref.shape, (out.shape, ref.shape)
    assert jnp.allclose(out, ref), "mismatch vs reference max-pool"
    print("KERNEL_OK")
</pallas_src>

<mosaic_0001>
module attributes {stable_mosaic.version = 11 : i64} {
  func.func @_spp_kernel(%arg0: i32, %arg1: memref<4x6x6x8xf32, #tpu.memory_space<vmem>>, %arg2: memref<2x2x2x8xf32, #tpu.memory_space<vmem>>, %arg3: memref<4x4x4x8xf32, #tpu.memory_space<vmem>>) attributes {dimension_semantics = [#tpu.dimension_semantics<parallel>], iteration_bounds = array<i64: 1>, scalar_prefetch = 0 : i64, scratch_operands = 0 : i64, tpu.core_type = #tpu.core_type<tc>, window_params = [{transform_indices = @transform_0, window_bounds = array<i64: 4, 6, 6, 8>}, {transform_indices = @transform_1, window_bounds = array<i64: 2, 2, 2, 8>}, {transform_indices = @transform_2, window_bounds = array<i64: 4, 4, 4, 8>}]} {
    %c0 = arith.constant 0 : index
    %c0_0 = arith.constant 0 : index
    %c0_1 = arith.constant 0 : index
    %c0_2 = arith.constant 0 : index
    %0 = vector.load %arg1[%c0, %c0_0, %c0_1, %c0_2] : memref<4x6x6x8xf32, #tpu.memory_space<vmem>>, vector<4x6x6x8xf32>
    %1 = vector.shape_cast %0 : vector<4x6x6x8xf32> to vector<2x2x6x6x8xf32>
    %cst = arith.constant dense<0xFF800000> : vector<2x6x6x8xf32>
    %2 = vector.multi_reduction <maximumf>, %1, %cst [1] : vector<2x2x6x6x8xf32> to vector<2x6x6x8xf32>
    %3 = vector.shape_cast %2 : vector<2x6x6x8xf32> to vector<2x2x3x6x8xf32>
    %cst_3 = arith.constant dense<0xFF800000> : vector<2x2x6x8xf32>
    %4 = vector.multi_reduction <maximumf>, %3, %cst_3 [2] : vector<2x2x3x6x8xf32> to vector<2x2x6x8xf32>
    %5 = vector.extract_strided_slice %4 {offsets = [0, 0, 0, 0], sizes = [2, 2, 3, 8], strides = [1, 1, 1, 1]} : vector<2x2x6x8xf32> to vector<2x2x3x8xf32>
    %cst_4 = arith.constant dense<0xFF800000> : vector<2x2x8xf32>
    %6 = vector.multi_reduction <maximumf>, %5, %cst_4 [2] : vector<2x2x3x8xf32> to vector<2x2x8xf32>
    %7 = vector.shape_cast %6 : vector<2x2x8xf32> to vector<2x2x1x8xf32>
    %8 = vector.extract_strided_slice %4 {offsets = [0, 0, 3, 0], sizes = [2, 2, 3, 8], strides = [1, 1, 1, 1]} : vector<2x2x6x8xf32> to vector<2x2x3x8xf32>
    %cst_5 = arith.constant dense<0xFF800000> : vector<2x2x8xf32>
    %9 = vector.multi_reduction <maximumf>, %8, %cst_5 [2] : vector<2x2x3x8xf32> to vector<2x2x8xf32>
    %10 = vector.shape_cast %9 : vector<2x2x8xf32> to vector<2x2x1x8xf32>
    %11 = tpu.concatenate %7, %10 in 2 : vector<2x2x1x8xf32>, vector<2x2x1x8xf32> -> vector<2x2x2x8xf32>
    %c0_6 = arith.constant 0 : index
    %c0_7 = arith.constant 0 : index
    %c0_8 = arith.constant 0 : index
    %c0_9 = arith.constant 0 : index
    %12 = vector.load %arg2[%c0_6, %c0_7, %c0_8, %c0_9] : memref<2x2x2x8xf32, #tpu.memory_space<vmem>>, vector<2x2x2x8xf32>
    tpu.vector_store %arg2[%c0_6, %c0_7, %c0_8, %c0_9], %11 {strides = array<i32>} : memref<2x2x2x8xf32, #tpu.memory_space<vmem>>, vector<2x2x2x8xf32>,
    %c0_10 = arith.constant 0 : index
    %c0_11 = arith.constant 0 : index
    %c0_12 = arith.constant 0 : index
    %c0_13 = arith.constant 0 : index
    %13 = vector.load %arg1[%c0_10, %c0_11, %c0_12, %c0_13] : memref<4x6x6x8xf32, #tpu.memory_space<vmem>>, vector<4x1x6x8xf32>
    %c0_14 = arith.constant 0 : index
    %c1 = arith.constant 1 : index
    %c0_15 = arith.constant 0 : index
    %c0_16 = arith.constant 0 : index
    %14 = vector.load %arg1[%c0_14, %c1, %c0_15, %c0_16] : memref<4x6x6x8xf32, #tpu.memory_space<vmem>>, vector<4x4x6x8xf32>
    %15 = vector.shape_cast %14 : vector<4x4x6x8xf32> to vector<4x2x2x6x8xf32>
    %cst_17 = arith.constant dense<0xFF800000> : vector<4x2x6x8xf32>
    %16 = vector.multi_reduction <maximumf>, %15, %cst_17 [2] : vector<4x2x2x6x8xf32> to vector<4x2x6x8xf32>
    %c0_18 = arith.constant 0 : index
    %c5 = arith.constant 5 : index
    %c0_19 = arith.constant 0 : index
    %c0_20 = arith.constant 0 : index
    %17 = vector.load %arg1[%c0_18, %c5, %c0_19, %c0_20] : memref<4x6x6x8xf32, #tpu.memory_space<vmem>>, vector<4x1x6x8xf32>
    %18 = tpu.concatenate %13, %16, %17 in 1 : vector<4x1x6x8xf32>, vector<4x2x6x8xf32>, vector<4x1x6x8xf32> -> vector<4x4x6x8xf32>
    %19 = vector.extract_strided_slice %18 {offsets = [0, 0, 0, 0], sizes = [4, 4, 1, 8], strides = [1, 1, 1, 1]} : vector<4x4x6x8xf32> to vector<4x4x1x8xf32>
    %cst_21 = arith.constant dense<0xFF800000> : vector<4x4x8xf32>
    %20 = vector.multi_reduction <maximumf>, %19, %cst_21 [2] : vector<4x4x1x8xf32> to vector<4x4x8xf32>
    %21 = vector.shape_cast %20 : vector<4x4x8xf32> to vector<4x4x1x8xf32>
    %22 = vector.extract_strided_slice %18 {offsets = [0, 0, 1, 0], sizes = [4, 4, 2, 8], strides = [1, 1, 1, 1]} : vector<4x4x6x8xf32> to vector<4x4x2x8xf32>
    %cst_22 = arith.constant dense<0xFF800000> : vector<4x4x8xf32>
    %23 = vector.multi_reduction <maximumf>, %22, %cst_22 [2] : vector<4x4x2x8xf32> to vector<4x4x8xf32>
    %24 = vector.shape_cast %23 : vector<4x4x8xf32> to vector<4x4x1x8xf32>
    %25 = vector.extract_strided_slice %18 {offsets = [0, 0, 3, 0], sizes = [4, 4, 2, 8], strides = [1, 1, 1, 1]} : vector<4x4x6x8xf32> to vector<4x4x2x8xf32>
    %cst_23 = arith.constant dense<0xFF800000> : vector<4x4x8xf32>
    %26 = vector.multi_reduction <maximumf>, %25, %cst_23 [2] : vector<4x4x2x8xf32> to vector<4x4x8xf32>
    %27 = vector.shape_cast %26 : vector<4x4x8xf32> to vector<4x4x1x8xf32>
    %28 = vector.extract_strided_slice %18 {offsets = [0, 0, 5, 0], sizes = [4, 4, 1, 8], strides = [1, 1, 1, 1]} : vector<4x4x6x8xf32> to vector<4x4x1x8xf32>
    %cst_24 = arith.constant dense<0xFF800000> : vector<4x4x8xf32>
    %29 = vector.multi_reduction <maximumf>, %28, %cst_24 [2] : vector<4x4x1x8xf32> to vector<4x4x8xf32>
    %30 = vector.shape_cast %29 : vector<4x4x8xf32> to vector<4x4x1x8xf32>
    %31 = tpu.concatenate %21, %24, %27, %30 in 2 : vector<4x4x1x8xf32>, vector<4x4x1x8xf32>, vector<4x4x1x8xf32>, vector<4x4x1x8xf32> -> vector<4x4x4x8xf32>
    %c0_25 = arith.constant 0 : index
    %c0_26 = arith.constant 0 : index
    %c0_27 = arith.constant 0 : index
    %c0_28 = arith.constant 0 : index
    %32 = vector.load %arg3[%c0_25, %c0_26, %c0_27, %c0_28] : memref<4x4x4x8xf32, #tpu.memory_space<vmem>>, vector<4x4x4x8xf32>
    tpu.vector_store %arg3[%c0_25, %c0_26, %c0_27, %c0_28], %31 {strides = array<i32>} : memref<4x4x4x8xf32, #tpu.memory_space<vmem>>, vector<4x4x4x8xf32>,
    return
  }
  func.func @transform_0(%arg0: i32) -> (i32, i32, i32, i32) {
    %c0_i32 = arith.constant 0 : i32
    %c0_i32_0 = arith.constant 0 : i32
    %c0_i32_1 = arith.constant 0 : i32
    %c0_i32_2 = arith.constant 0 : i32
    return %c0_i32, %c0_i32_0, %c0_i32_1, %arg0 : i32, i32, i32, i32
  }
  func.func @transform_1(%arg0: i32) -> (i32, i32, i32, i32) {
    %c0_i32 = arith.constant 0 : i32
    %c0_i32_0 = arith.constant 0 : i32
    %c0_i32_1 = arith.constant 0 : i32
    %c0_i32_2 = arith.constant 0 : i32
    return %c0_i32, %c0_i32_0, %c0_i32_1, %arg0 : i32, i32, i32, i32
  }
  func.func @transform_2(%arg0: i32) -> (i32, i32, i32, i32) {
    %c0_i32 = arith.constant 0 : i32
    %c0_i32_0 = arith.constant 0 : i32
    %c0_i32_1 = arith.constant 0 : i32
    %c0_i32_2 = arith.constant 0 : i32
    return %c0_i32, %c0_i32_0, %c0_i32_1, %arg0 : i32, i32, i32, i32
  }
}

</mosaic_0001>

<llo_original>
// kernel: spp_forward.1
$region0: #{spp_forward.1}
  #allocation0 [shape = 'u32[]', space=smem, size = 0x4, offset = 0x4, fixed_abs, tag = 'smem constant byte address 0x4 - core index']
  #allocation1 [shape = 'u32[144,128]{1,0:T(1,128)}', space=vmem, size = 0x12000, scoped, tag = 'internal scratch']
  %s0 = inlined_call_operand.vmem [shape: f32[4,6,6,8], index: 0, kind: input, shape index: {}]
  %s1 = inlined_call_operand.vmem [shape: f32[2,2,2,8], index: 1, kind: output, shape index: {0}]
  %s2 = inlined_call_operand.vmem [shape: f32[4,4,4,8], index: 2, kind: output, shape index: {1}]
  %3 = xla_tuple %s1, %s2
  %s4 = sld [smem:[#allocation0]]
  $region22: #{spp_forward.1} parent=0
    _
  %s6 = ssub.s32 1, %s4
  %s7 = scalar_select 0, %s6, %s4
  // Predicated region
  $region2: #{spp_forward.1} parent=0 // pred_check
    _
  $region3: #{spp_forward.1} parent=0 // pred_check_branch
    %9 = sbr.rel (0) target = $region5
  $region4: #{spp_forward.1} parent=0 // pred_region
    _
  $region5: #{spp_forward.1} parent=0 // pred_fallthru
    _
  %v10 = vld [vmem:[%s0] sm:$0x3f]
  %v11 = vld [vmem:[%s0 + $0x8] sm:$0x3f]
  %v12 = vld [vmem:[%s0 + $0x10] sm:$0x3f]
  %v13 = vld [vmem:[%s0 + $0x18] sm:$0x3f]
  %v14 = vld [vmem:[%s0 + $0x20] sm:$0x3f]
  %v15 = vld [vmem:[%s0 + $0x28] sm:$0x3f]
  %v16 = vld [vmem:[%s0 + $0x30] sm:$0x3f]
  %v17 = vld [vmem:[%s0 + $0x38] sm:$0x3f]
  %v18 = vld [vmem:[%s0 + $0x40] sm:$0x3f]
  %v19 = vld [vmem:[%s0 + $0x48] sm:$0x3f]
  %v20 = vld [vmem:[%s0 + $0x50] sm:$0x3f]
  %v21 = vld [vmem:[%s0 + $0x58] sm:$0x3f]
  %v22 = vld [vmem:[%s0 + $0x60] sm:$0x3f]
  %v23 = vld [vmem:[%s0 + $0x68] sm:$0x3f]
  %v24 = vld [vmem:[%s0 + $0x70] sm:$0x3f]
  %v25 = vld [vmem:[%s0 + $0x78] sm:$0x3f]
  %v26 = vld [vmem:[%s0 + $0x80] sm:$0x3f]
  %v27 = vld [vmem:[%s0 + $0x88] sm:$0x3f]
  %v28 = vld [vmem:[%s0 + $0x90] sm:$0x3f]
  %v29 = vld [vmem:[%s0 + $0x98] sm:$0x3f]
  %v30 = vld [vmem:[%s0 + $0xa0] sm:$0x3f]
  %v31 = vld [vmem:[%s0 + $0xa8] sm:$0x3f]
  %v32 = vld [vmem:[%s0 + $0xb0] sm:$0x3f]
  %v33 = vld [vmem:[%s0 + $0xb8] sm:$0x3f]
  %vm34 = vcmask 62464
  %v35 = vsel %vm34, %v10, -inf
  %v36 = vsel %vm34, %v16, -inf
  %v37 = vmax.f32 %v35, %v36
  %v38 = vsel %vm34, %v11, -inf
  %v39 = vsel %vm34, %v17, -inf
  %v40 = vmax.f32 %v38, %v39
  %v41 = vsel %vm34, %v12, -inf
  %v42 = vsel %vm34, %v18, -inf
  %v43 = vmax.f32 %v41, %v42
  %v44 = vsel %vm34, %v13, -inf
  %v45 = vsel %vm34, %v19, -inf
  %v46 = vmax.f32 %v44, %v45
  %v47 = vsel %vm34, %v14, -inf
  %v48 = vsel %vm34, %v20, -inf
  %v49 = vmax.f32 %v47, %v48
  %v50 = vsel %vm34, %v15, -inf
  %v51 = vsel %vm34, %v21, -inf
  %v52 = vmax.f32 %v50, %v51
  %v53 = vsel %vm34, %v22, -inf
  %v54 = vsel %vm34, %v28, -inf
  %v55 = vmax.f32 %v53, %v54
  %v56 = vsel %vm34, %v23, -inf
  %v57 = vsel %vm34, %v29, -inf
  %v58 = vmax.f32 %v56, %v57
  %v59 = vsel %vm34, %v24, -inf
  %v60 = vsel %vm34, %v30, -inf
  %v61 = vmax.f32 %v59, %v60
  %v62 = vsel %vm34, %v25, -inf
  %v63 = vsel %vm34, %v31, -inf
  %v64 = vmax.f32 %v62, %v63
  %v65 = vsel %vm34, %v26, -inf
  %v66 = vsel %vm34, %v32, -inf
  %v67 = vmax.f32 %v65, %v66
  %v68 = vsel %vm34, %v27, -inf
  %v69 = vsel %vm34, %v33, -inf
  %v70 = vmax.f32 %v68, %v69
  %v71 = vsel %vm34, %v37, -inf
  %v72 = vsel %vm34, %v40, -inf
  %v73 = vmax.f32 %v71, %v72
  %v74 = vsel %vm34, %v43, -inf
  %v75 = vmax.f32 %v73, %v74
  %v76 = vsel %vm34, %v46, -inf
  %v77 = vsel %vm34, %v49, -inf
  %v78 = vmax.f32 %v76, %v77
  %v79 = vsel %vm34, %v52, -inf
  %v80 = vmax.f32 %v78, %v79
  %v81 = vsel %vm34, %v55, -inf
  %v82 = vsel %vm34, %v58, -inf
  %v83 = vmax.f32 %v81, %v82
  %v84 = vsel %vm34, %v61, -inf
  %v85 = vmax.f32 %v83, %v84
  %v86 = vsel %vm34, %v64, -inf
  %v87 = vsel %vm34, %v67, -inf
  %v88 = vmax.f32 %v86, %v87
  %v89 = vsel %vm34, %v70, -inf
  %v90 = vmax.f32 %v88, %v89
  %vm91 = vcmask 59392
  %v92 = vsel %vm91, %v75, -inf
  %v93 = vrot.slane %v92, 4
  %v94 = vmax.f32 %v92, %v93
  %v95 = vrot.slane %v94, 2
  %v96 = vmax.f32 %v94, %v95
  %v97 = vrot.slane %v96, 1
  %v98 = vmax.f32 %v96, %v97
  %v99 = vsel %vm91, %v80, -inf
  %v100 = vrot.slane %v99, 4
  %v101 = vmax.f32 %v99, %v100
  %v102 = vrot.slane %v101, 2
  %v103 = vmax.f32 %v101, %v102
  %v104 = vrot.slane %v103, 1
  %v105 = vmax.f32 %v103, %v104
  %v106 = vsel %vm91, %v85, -inf
  %v107 = vrot.slane %v106, 4
  %v108 = vmax.f32 %v106, %v107
  %v109 = vrot.slane %v108, 2
  %v110 = vmax.f32 %v108, %v109
  %v111 = vrot.slane %v110, 1
  %v112 = vmax.f32 %v110, %v111
  %v113 = vsel %vm91, %v90, -inf
  %v114 = vrot.slane %v113, 4
  %v115 = vmax.f32 %v113, %v114
  %v116 = vrot.slane %v115, 2
  %v117 = vmax.f32 %v115, %v116
  %v118 = vrot.slane %v117, 1
  %v119 = vmax.f32 %v117, %v118
  %vm120 = vcmask 62467
  %v121 = vsel %vm120, %v75, -inf
  %v122 = vrot.slane %v121, 4
  %v123 = vmax.f32 %v121, %v122
  %v124 = vrot.slane %v123, 2
  %v125 = vmax.f32 %v123, %v124
  %v126 = vrot.slane %v125, 1
  %v127 = vmax.f32 %v125, %v126
  %v128 = vsel %vm120, %v80, -inf
  %v129 = vrot.slane %v128, 4
  %v130 = vmax.f32 %v128, %v129
  %v131 = vrot.slane %v130, 2
  %v132 = vmax.f32 %v130, %v131
  %v133 = vrot.slane %v132, 1
  %v134 = vmax.f32 %v132, %v133
  %v135 = vsel %vm120, %v85, -inf
  %v136 = vrot.slane %v135, 4
  %v137 = vmax.f32 %v135, %v136
  %v138 = vrot.slane %v137, 2
  %v139 = vmax.f32 %v137, %v138
  %v140 = vrot.slane %v139, 1
  %v141 = vmax.f32 %v139, %v140
  %v142 = vsel %vm120, %v90, -inf
  %v143 = vrot.slane %v142, 4
  %v144 = vmax.f32 %v142, %v143
  %v145 = vrot.slane %v144, 2
  %v146 = vmax.f32 %v144, %v145
  %v147 = vrot.slane %v146, 1
  %v148 = vmax.f32 %v146, %v147
  %vm149 = vcmask 1040384
  %v150 = vsel %vm149, %v98, %v127
  %v151 = vsel %vm149, %v105, %v134
  %v152 = vsel %vm149, %v112, %v141
  %v153 = vsel %vm149, %v119, %v148
  %vm154 = vcmask 58368
  %155 = vst.msk [vmem:[%s1] sm:$0x3] %vm154, %v150
  %156 = vst.msk [vmem:[%s1 + $0x2] sm:$0x3] %vm154, %v151
  %157 = vst.msk [vmem:[%s1 + $0x4] sm:$0x3] %vm154, %v152
  %158 = vst.msk [vmem:[%s1 + $0x6] sm:$0x3] %vm154, %v153
  %v159 = vld [vmem:[%s0] sm:$0x3f]
  %v160 = vld [vmem:[%s0 + $0x30] sm:$0x3f]
  %v161 = vld [vmem:[%s0 + $0x60] sm:$0x3f]
  %v162 = vld [vmem:[%s0 + $0x90] sm:$0x3f]
  %s163 = scalar_lea.vmem %s0, 8
  %v164 = vld [vmem:[%s163] sm:$0x3f]
  %v165 = vld [vmem:[%s163 + $0x8] sm:$0x3f]
  %v166 = vld [vmem:[%s163 + $0x10] sm:$0x3f]
  %v167 = vld [vmem:[%s163 + $0x18] sm:$0x3f]
  %v168 = vld [vmem:[%s163 + $0x30] sm:$0x3f]
  %v169 = vld [vmem:[%s163 + $0x38] sm:$0x3f]
  %v170 = vld [vmem:[%s163 + $0x40] sm:$0x3f]
  %v171 = vld [vmem:[%s163 + $0x48] sm:$0x3f]
  %v172 = vld [vmem:[%s163 + $0x60] sm:$0x3f]
  %v173 = vld [vmem:[%s163 + $0x68] sm:$0x3f]
  %v174 = vld [vmem:[%s163 + $0x70] sm:$0x3f]
  %v175 = vld [vmem:[%s163 + $0x78] sm:$0x3f]
  %v176 = vld [vmem:[%s163 + $0x90] sm:$0x3f]
  %v177 = vld [vmem:[%s163 + $0x98] sm:$0x3f]
  %v178 = vld [vmem:[%s163 + $0xa0] sm:$0x3f]
  %v179 = vld [vmem:[%s163 + $0xa8] sm:$0x3f]
  %v180 = vsel %vm34, %v164, -inf
  %v181 = vsel %vm34, %v165, -inf
  %v182 = vmax.f32 %v180, %v181
  %v183 = vsel %vm34, %v166, -inf
  %v184 = vsel %vm34, %v167, -inf
  %v185 = vmax.f32 %v183, %v184
  %v186 = vsel %vm34, %v168, -inf
  %v187 = vsel %vm34, %v169, -inf
  %v188 = vmax.f32 %v186, %v187
  %v189 = vsel %vm34, %v170, -inf
  %v190 = vsel %vm34, %v171, -inf
  %v191 = vmax.f32 %v189, %v190
  %v192 = vsel %vm34, %v172, -inf
  %v193 = vsel %vm34, %v173, -inf
  %v194 = vmax.f32 %v192, %v193
  %v195 = vsel %vm34, %v174, -inf
  %v196 = vsel %vm34, %v175, -inf
  %v197 = vmax.f32 %v195, %v196
  %v198 = vsel %vm34, %v176, -inf
  %v199 = vsel %vm34, %v177, -inf
  %v200 = vmax.f32 %v198, %v199
  %v201 = vsel %vm34, %v178, -inf
  %v202 = vsel %vm34, %v179, -inf
  %v203 = vmax.f32 %v201, %v202
  %s204 = scalar_lea.vmem %s0, 40
  %v205 = vld [vmem:[%s204] sm:$0x3f]
  %v206 = vld [vmem:[%s204 + $0x30] sm:$0x3f]
  %v207 = vld [vmem:[%s204 + $0x60] sm:$0x3f]
  %v208 = vld [vmem:[%s204 + $0x90] sm:$0x3f]
  %vm209 = vcmask 59393
  %v210 = vsel %vm209, %v159, -inf
  %v211 = vrot.slane %v210, 4
  %v212 = vmax.f32 %v210, %v211
  %v213 = vrot.slane %v212, 2
  %v214 = vmax.f32 %v212, %v213
  %v215 = vrot.slane %v214, 1
  %v216 = vmax.f32 %v214, %v215
  %v217 = vsel %vm209, %v182, -inf
  %v218 = vrot.slane %v217, 4
  %v219 = vmax.f32 %v217, %v218
  %v220 = vrot.slane %v219, 2
  %v221 = vmax.f32 %v219, %v220
  %v222 = vrot.slane %v221, 1
  %v223 = vmax.f32 %v221, %v222
  %v224 = vsel %vm209, %v185, -inf
  %v225 = vrot.slane %v224, 4
  %v226 = vmax.f32 %v224, %v225
  %v227 = vrot.slane %v226, 2
  %v228 = vmax.f32 %v226, %v227
  %v229 = vrot.slane %v228, 1
  %v230 = vmax.f32 %v228, %v229
  %v231 = vsel %vm209, %v205, -inf
  %v232 = vrot.slane %v231, 4
  %v233 = vmax.f32 %v231, %v232
  %v234 = vrot.slane %v233, 2
  %v235 = vmax.f32 %v233, %v234
  %v236 = vrot.slane %v235, 1
  %v237 = vmax.f32 %v235, %v236
  %v238 = vsel %vm209, %v160, -inf
  %v239 = vrot.slane %v238, 4
  %v240 = vmax.f32 %v238, %v239
  %v241 = vrot.slane %v240, 2
  %v242 = vmax.f32 %v240, %v241
  %v243 = vrot.slane %v242, 1
  %v244 = vmax.f32 %v242, %v243
  %v245 = vsel %vm209, %v188, -inf
  %v246 = vrot.slane %v245, 4
  %v247 = vmax.f32 %v245, %v246
  %v248 = vrot.slane %v247, 2
  %v249 = vmax.f32 %v247, %v248
  %v250 = vrot.slane %v249, 1
  %v251 = vmax.f32 %v249, %v250
  %v252 = vsel %vm209, %v191, -inf
  %v253 = vrot.slane %v252, 4
  %v254 = vmax.f32 %v252, %v253
  %v255 = vrot.slane %v254, 2
  %v256 = vmax.f32 %v254, %v255
  %v257 = vrot.slane %v256, 1
  %v258 = vmax.f32 %v256, %v257
  %v259 = vsel %vm209, %v206, -inf
  %v260 = vrot.slane %v259, 4
  %v261 = vmax.f32 %v259, %v260
  %v262 = vrot.slane %v261, 2
  %v263 = vmax.f32 %v261, %v262
  %v264 = vrot.slane %v263, 1
  %v265 = vmax.f32 %v263, %v264
  %v266 = vsel %vm209, %v161, -inf
  %v267 = vrot.slane %v266, 4
  %v268 = vmax.f32 %v266, %v267
  %v269 = vrot.slane %v268, 2
  %v270 = vmax.f32 %v268, %v269
  %v271 = vrot.slane %v270, 1
  %v272 = vmax.f32 %v270, %v271
  %v273 = vsel %vm209, %v194, -inf
  %v274 = vrot.slane %v273, 4
  %v275 = vmax.f32 %v273, %v274
  %v276 = vrot.slane %v275, 2
  %v277 = vmax.f32 %v275, %v276
  %v278 = vrot.slane %v277, 1
  %v279 = vmax.f32 %v277, %v278
  %v280 = vsel %vm209, %v197, -inf
  %v281 = vrot.slane %v280, 4
  %v282 = vmax.f32 %v280, %v281
  %v283 = vrot.slane %v282, 2
  %v284 = vmax.f32 %v282, %v283
  %v285 = vrot.slane %v284, 1
  %v286 = vmax.f32 %v284, %v285
  %v287 = vsel %vm209, %v207, -inf
  %v288 = vrot.slane %v287, 4
  %v289 = vmax.f32 %v287, %v288
  %v290 = vrot.slane %v289, 2
  %v291 = vmax.f32 %v289, %v290
  %v292 = vrot.slane %v291, 1
  %v293 = vmax.f32 %v291, %v292
  %v294 = vsel %vm209, %v162, -inf
  %v295 = vrot.slane %v294, 4
  %v296 = vmax.f32 %v294, %v295
  %v297 = vrot.slane %v296, 2
  %v298 = vmax.f32 %v296, %v297
  %v299 = vrot.slane %v298, 1
  %v300 = vmax.f32 %v298, %v299
  %v301 = vsel %vm209, %v200, -inf
  %v302 = vrot.slane %v301, 4
  %v303 = vmax.f32 %v301, %v302
  %v304 = vrot.slane %v303, 2
  %v305 = vmax.f32 %v303, %v304
  %v306 = vrot.slane %v305, 1
  %v307 = vmax.f32 %v305, %v306
  %v308 = vsel %vm209, %v203, -inf
  %v309 = vrot.slane %v308, 4
  %v310 = vmax.f32 %v308, %v309
  %v311 = vrot.slane %v310, 2
  %v312 = vmax.f32 %v310, %v311
  %v313 = vrot.slane %v312, 1
  %v314 = vmax.f32 %v312, %v313
  %v315 = vsel %vm209, %v208, -inf
  %v316 = vrot.slane %v315, 4
  %v317 = vmax.f32 %v315, %v316
  %v318 = vrot.slane %v317, 2
  %v319 = vmax.f32 %v317, %v318
  %v320 = vrot.slane %v319, 1
  %v321 = vmax.f32 %v319, %v320
  %vm322 = vcmask 61443
  %v323 = vsel %vm322, %v159, -inf
  %v324 = vrot.slane %v323, 4
  %v325 = vmax.f32 %v323, %v324
  %v326 = vrot.slane %v325, 2
  %v327 = vmax.f32 %v325, %v326
  %v328 = vrot.slane %v327, 1
  %v329 = vmax.f32 %v327, %v328
  %v330 = vsel %vm322, %v182, -inf
  %v331 = vrot.slane %v330, 4
  %v332 = vmax.f32 %v330, %v331
  %v333 = vrot.slane %v332, 2
  %v334 = vmax.f32 %v332, %v333
  %v335 = vrot.slane %v334, 1
  %v336 = vmax.f32 %v334, %v335
  %v337 = vsel %vm322, %v185, -inf
  %v338 = vrot.slane %v337, 4
  %v339 = vmax.f32 %v337, %v338
  %v340 = vrot.slane %v339, 2
  %v341 = vmax.f32 %v339, %v340
  %v342 = vrot.slane %v341, 1
  %v343 = vmax.f32 %v341, %v342
  %v344 = vsel %vm322, %v205, -inf
  %v345 = vrot.slane %v344, 4
  %v346 = vmax.f32 %v344, %v345
  %v347 = vrot.slane %v346, 2
  %v348 = vmax.f32 %v346, %v347
  %v349 = vrot.slane %v348, 1
  %v350 = vmax.f32 %v348, %v349
  %v351 = vsel %vm322, %v160, -inf
  %v352 = vrot.slane %v351, 4
  %v353 = vmax.f32 %v351, %v352
  %v354 = vrot.slane %v353, 2
  %v355 = vmax.f32 %v353, %v354
  %v356 = vrot.slane %v355, 1
  %v357 = vmax.f32 %v355, %v356
  %v358 = vsel %vm322, %v188, -inf
  %v359 = vrot.slane %v358, 4
  %v360 = vmax.f32 %v358, %v359
  %v361 = vrot.slane %v360, 2
  %v362 = vmax.f32 %v360, %v361
  %v363 = vrot.slane %v362, 1
  %v364 = vmax.f32 %v362, %v363
  %v365 = vsel %vm322, %v191, -inf
  %v366 = vrot.slane %v365, 4
  %v367 = vmax.f32 %v365, %v366
  %v368 = vrot.slane %v367, 2
  %v369 = vmax.f32 %v367, %v368
  %v370 = vrot.slane %v369, 1
  %v371 = vmax.f32 %v369, %v370
  %v372 = vsel %vm322, %v206, -inf
  %v373 = vrot.slane %v372, 4
  %v374 = vmax.f32 %v372, %v373
  %v375 = vrot.slane %v374, 2
  %v376 = vmax.f32 %v374, %v375
  %v377 = vrot.slane %v376, 1
  %v378 = vmax.f32 %v376, %v377
  %v379 = vsel %vm322, %v161, -inf
  %v380 = vrot.slane %v379, 4
  %v381 = vmax.f32 %v379, %v380
  %v382 = vrot.slane %v381, 2
  %v383 = vmax.f32 %v381, %v382
  %v384 = vrot.slane %v383, 1
  %v385 = vmax.f32 %v383, %v384
  %v386 = vsel %vm322, %v194, -inf
  %v387 = vrot.slane %v386, 4
  %v388 = vmax.f32 %v386, %v387
  %v389 = vrot.slane %v388, 2
  %v390 = vmax.f32 %v388, %v389
  %v391 = vrot.slane %v390, 1
  %v392 = vmax.f32 %v390, %v391
  %v393 = vsel %vm322, %v197, -inf
  %v394 = vrot.slane %v393, 4
  %v395 = vmax.f32 %v393, %v394
  %v396 = vrot.slane %v395, 2
  %v397 = vmax.f32 %v395, %v396
  %v398 = vrot.slane %v397, 1
  %v399 = vmax.f32 %v397, %v398
  %v400 = vsel %vm322, %v207, -inf
  %v401 = vrot.slane %v400, 4
  %v402 = vmax.f32 %v400, %v401
  %v403 = vrot.slane %v402, 2
  %v404 = vmax.f32 %v402, %v403
  %v405 = vrot.slane %v404, 1
  %v406 = vmax.f32 %v404, %v405
  %v407 = vsel %vm322, %v162, -inf
  %v408 = vrot.slane %v407, 4
  %v409 = vmax.f32 %v407, %v408
  %v410 = vrot.slane %v409, 2
  %v411 = vmax.f32 %v409, %v410
  %v412 = vrot.slane %v411, 1
  %v413 = vmax.f32 %v411, %v412
  %v414 = vsel %vm322, %v200, -inf
  %v415 = vrot.slane %v414, 4
  %v416 = vmax.f32 %v414, %v415
  %v417 = vrot.slane %v416, 2
  %v418 = vmax.f32 %v416, %v417
  %v419 = vrot.slane %v418, 1
  %v420 = vmax.f32 %v418, %v419
  %v421 = vsel %vm322, %v203, -inf
  %v422 = vrot.slane %v421, 4
  %v423 = vmax.f32 %v421, %v422
  %v424 = vrot.slane %v423, 2
  %v425 = vmax.f32 %v423, %v424
  %v426 = vrot.slane %v425, 1
  %v427 = vmax.f32 %v425, %v426
  %v428 = vsel %vm322, %v208, -inf
  %v429 = vrot.slane %v428, 4
  %v430 = vmax.f32 %v428, %v429
  %v431 = vrot.slane %v430, 2
  %v432 = vmax.f32 %v430, %v431
  %v433 = vrot.slane %v432, 1
  %v434 = vmax.f32 %v432, %v433
  %v451 = vrot.slane %v159, 2
  %v452 = vrot.slane %v182, 2
  %v453 = vrot.slane %v185, 2
  %v454 = vrot.slane %v205, 2
  %v455 = vrot.slane %v160, 2
  %v456 = vrot.slane %v188, 2
  %v457 = vrot.slane %v191, 2
  %v458 = vrot.slane %v206, 2
  %v459 = vrot.slane %v161, 2
  %v460 = vrot.slane %v194, 2
  %v461 = vrot.slane %v197, 2
  %v462 = vrot.slane %v207, 2
  %v463 = vrot.slane %v162, 2
  %v464 = vrot.slane %v200, 2
  %v465 = vrot.slane %v203, 2
  %v466 = vrot.slane %v208, 2
  %v483 = vsel %vm149, %v159, %v216
  %v484 = vsel %vm149, %v182, %v223
  %v485 = vsel %vm149, %v185, %v230
  %v486 = vsel %vm149, %v205, %v237
  %v487 = vsel %vm149, %v160, %v244
  %v488 = vsel %vm149, %v188, %v251
  %v489 = vsel %vm149, %v191, %v258
  %v490 = vsel %vm149, %v206, %v265
  %v491 = vsel %vm149, %v161, %v272
  %v492 = vsel %vm149, %v194, %v279
  %v493 = vsel %vm149, %v197, %v286
  %v494 = vsel %vm149, %v207, %v293
  %v495 = vsel %vm149, %v162, %v300
  %v496 = vsel %vm149, %v200, %v307
  %v497 = vsel %vm149, %v203, %v314
  %v498 = vsel %vm149, %v208, %v321
  %vm499 = vcmask 1041408
  %v500 = vsel %vm499, %v483, %v329
  %v501 = vsel %vm499, %v484, %v336
  %v502 = vsel %vm499, %v485, %v343
  %v503 = vsel %vm499, %v486, %v350
  %v504 = vsel %vm499, %v487, %v357
  %v505 = vsel %vm499, %v488, %v364
  %v506 = vsel %vm499, %v489, %v371
  %v507 = vsel %vm499, %v490, %v378
  %v508 = vsel %vm499, %v491, %v385
  %v509 = vsel %vm499, %v492, %v392
  %v510 = vsel %vm499, %v493, %v399
  %v511 = vsel %vm499, %v494, %v406
  %v512 = vsel %vm499, %v495, %v413
  %v513 = vsel %vm499, %v496, %v420
  %v514 = vsel %vm499, %v497, %v427
  %v515 = vsel %vm499, %v498, %v434
  %vm516 = vcmask 1042432
  %v517 = vsel %vm516, %v500, %v451
  %v518 = vsel %vm516, %v501, %v452
  %v519 = vsel %vm516, %v502, %v453
  %v520 = vsel %vm516, %v503, %v454
  %v521 = vsel %vm516, %v504, %v455
  %v522 = vsel %vm516, %v505, %v456
  %v523 = vsel %vm516, %v506, %v457
  %v524 = vsel %vm516, %v507, %v458
  %v525 = vsel %vm516, %v508, %v459
  %v526 = vsel %vm516, %v509, %v460
  %v527 = vsel %vm516, %v510, %v461
  %v528 = vsel %vm516, %v511, %v462
  %v529 = vsel %vm516, %v512, %v463
  %v530 = vsel %vm516, %v513, %v464
  %v531 = vsel %vm516, %v514, %v465
  %v532 = vsel %vm516, %v515, %v466
  %vm533 = vcmask 60416
  %534 = vst.msk [vmem:[%s2] sm:$0xf] %vm533, %v517
  %535 = vst.msk [vmem:[%s2 + $0x4] sm:$0xf] %vm533, %v518
  %536 = vst.msk [vmem:[%s2 + $0x8] sm:$0xf] %vm533, %v519
  %537 = vst.msk [vmem:[%s2 + $0xc] sm:$0xf] %vm533, %v520
  %538 = vst.msk [vmem:[%s2 + $0x10] sm:$0xf] %vm533, %v521
  %539 = vst.msk [vmem:[%s2 + $0x14] sm:$0xf] %vm533, %v522
  %540 = vst.msk [vmem:[%s2 + $0x18] sm:$0xf] %vm533, %v523
  %541 = vst.msk [vmem:[%s2 + $0x1c] sm:$0xf] %vm533, %v524
  %542 = vst.msk [vmem:[%s2 + $0x20] sm:$0xf] %vm533, %v525
  %543 = vst.msk [vmem:[%s2 + $0x24] sm:$0xf] %vm533, %v526
  %544 = vst.msk [vmem:[%s2 + $0x28] sm:$0xf] %vm533, %v527
  %545 = vst.msk [vmem:[%s2 + $0x2c] sm:$0xf] %vm533, %v528
  %546 = vst.msk [vmem:[%s2 + $0x30] sm:$0xf] %vm533, %v529
  %547 = vst.msk [vmem:[%s2 + $0x34] sm:$0xf] %vm533, %v530
  %548 = vst.msk [vmem:[%s2 + $0x38] sm:$0xf] %vm533, %v531
  %549 = vst.msk [vmem:[%s2 + $0x3c] sm:$0xf] %vm533, %v532
  // Predicated region
  $region6: #{spp_forward.1} parent=0 // pred_check
    _
  $region7: #{spp_forward.1} parent=0 // pred_check_branch
    %551 = sbr.rel (0) target = $region9
  $region8: #{spp_forward.1} parent=0 // pred_region
    _
  $region9: #{spp_forward.1} parent=0 // pred_fallthru
    _
  // Predicated region
  $region10: #{spp_forward.1} parent=0 // pred_check
    _
  $region11: #{spp_forward.1} parent=0 // pred_check_branch
    %553 = sbr.rel (0) target = $region13
  $region12: #{spp_forward.1} parent=0 // pred_region
    _
  $region13: #{spp_forward.1} parent=0 // pred_fallthru
    _
  // Predicated region
  $region14: #{spp_forward.1} parent=0 // pred_check
    _
  $region15: #{spp_forward.1} parent=0 // pred_check_branch
    %555 = sbr.rel (0) target = $region17
  $region16: #{spp_forward.1} parent=0 // pred_region
    _
  $region17: #{spp_forward.1} parent=0 // pred_fallthru
    _
  // Predicated region
  $region18: #{spp_forward.1} parent=0 // pred_check
    _
  $region19: #{spp_forward.1} parent=0 // pred_check_branch
    %557 = sbr.rel (0) target = $region21
  $region20: #{spp_forward.1} parent=0 // pred_region
    _
  $region21: #{spp_forward.1} parent=0 // pred_fallthru
    _

</llo_original>
